<compile_context>
chip_gen: v5e
topology: v5e:2x2
jax: 0.10.0
libtpu: 0.0.40
codegen_flags: <defaults>
</compile_context>

<pallas_src>
import functools

import jax
import jax.numpy as jnp
from jax.experimental import pallas as pl
from jax.experimental.pallas import tpu as pltpu


def _round_up(x, m):
    return ((x + m - 1) // m) * m


def _tpu_cores_per_device():
    """TensorCores sharing one Pallas grid ('megacore'): 2 on v4/v5p/v7x."""
    try:
        kind = jax.devices()[0].device_kind.lower()
    except Exception:
        return 1
    return 2 if ("v4" in kind or "v5p" in kind or "v7" in kind) else 1


def _vmem_capacity_bytes():
    try:
        return int(pltpu.get_tpu_info().vmem_capacity_bytes)
    except Exception:
        return 64 << 20  # conservative: v7x per-TC VMEM


# --------------------------------------------------------------------------
# Fused single-kernel path: one (TB, C, HW) block per grid step.
# --------------------------------------------------------------------------
def _cse_fused_kernel(x_ref, w1_ref, p_ref, o_ref, *, inv_hw):
    # x_ref: (TB, C, HW) block. w1_ref: (C, Cr) BN-folded conv1 weight.
    # p_ref: (3, Cr) packed small params: row0=b1', row1=w2, row2[0]=b2.
    x = x_ref[...]                                          # (TB, C, HW)

    # AdaptiveAvgPool2d(1): exact mean over the full (unpadded) HW extent.
    pooled = jnp.sum(x, axis=-1) * inv_hw                   # (TB, C)

    p = p_ref[...]                                          # (3, Cr)
    b1 = p[0:1, :]                                          # (1, Cr)
    w2 = p[1:2, :]                                          # (1, Cr)
    b2 = p[2:3, 0:1]                                        # (1, 1)

    # Conv1x1(C -> Cr) with BN folded in, then ReLU.
    y = jnp.dot(pooled, w1_ref[...],
                preferred_element_type=jnp.float32) + b1    # (TB, Cr)
    y = jnp.maximum(y, 0.0)

    # Conv1x1(Cr -> 1) as a lane reduce, then Sigmoid.
    z = jnp.sum(y * w2, axis=-1, keepdims=True) + b2        # (TB, 1)
    scale = jax.nn.sigmoid(z)                               # (TB, 1)

    # Per-sample scalar broadcast; fresh read so the multiply can stream.
    o_ref[...] = x_ref[...] * scale[:, :, None]


# --------------------------------------------------------------------------
# Split path for very large per-sample planes: (1) HW-tiled pooling with a
# resident accumulator, (2) tiny squeeze/excitation in plain JAX, (3) HW-tiled
# rescale.  Costs one extra read pass of x but keeps blocks ~4 MiB.
# --------------------------------------------------------------------------
def _cse_pool_kernel(x_ref, s_ref, *, hw, thw):
    h = pl.program_id(1)

    @pl.when(h == 0)
    def _():
        s_ref[...] = jnp.zeros_like(s_ref)

    x = x_ref[...]                                          # (1, C, THW)
    # Mask out-of-range spatial columns of the (possibly partial) last tile.
    col = jax.lax.broadcasted_iota(jnp.int32, x.shape, 2) + h * thw
    x = jnp.where(col < hw, x, 0.0)
    s_ref[...] += jnp.sum(x, axis=-1)[:, None, :]           # (1, 1, C)


def _cse_rescale_kernel(x_ref, scale_ref, o_ref):
    # x_ref/o_ref: (1, C, THW); scale_ref: (1, 1, 1) per-sample scalar.
    o_ref[...] = x_ref[...] * scale_ref[...]


# --------------------------------------------------------------------------
# Wrapper
# --------------------------------------------------------------------------
def cse_forward(x_nchw, params, *,
                block_target_bytes=4 << 20,     # ~4 MiB blocks (v7x/v6e/v5e)
                large_sample_bytes=6 << 20):    # above this -> split path
    """x_nchw: (N, C, H, W) float32. Returns (N, C, H, W) float32."""
    N, C, H, W = x_nchw.shape
    HW = H * W

    w1_pt, b1_pt, gamma, beta, rmean, rvar, w2_pt, b2_pt = params
    Cr = w1_pt.shape[0]
    eps = 1e-5

    # ---- Fold BatchNorm (inference mode) into conv1 at trace time. ----
    inv_std = jax.lax.rsqrt(rvar + eps)                     # (Cr,)
    bn_scale = gamma * inv_std                              # (Cr,)
    w1 = w1_pt.T * bn_scale[None, :]                        # (C, Cr)
    b1 = (b1_pt - rmean) * bn_scale + beta                  # (Cr,)

    packed = jnp.stack([
        b1,                                                 # row 0: b1'
        w2_pt[0],                                           # row 1: w2
        jnp.full((Cr,), b2_pt[0], jnp.float32),             # row 2: b2 at [2,0]
    ], axis=0)                                              # (3, Cr)

    x = x_nchw.reshape(N, C, HW)                            # layout-free reshape

    vmem_cap = _vmem_capacity_bytes()
    cores = _tpu_cores_per_device()

    # VMEM footprint of one sample's (C, HW) plane (layout pads to (8, 128)).
    bytes_per_sample = _round_up(C, 8) * _round_up(HW, 128) * 4
    param_bytes = (_round_up(C, 8) * _round_up(Cr, 128)
                   + 8 * _round_up(Cr, 128)) * 4

    if bytes_per_sample <= large_sample_bytes:
        # ------------------ fused single-kernel path ------------------
        TB = max(1, min(N, block_target_bytes // bytes_per_sample))
        if cores > 1 and N > 1:
            # Megacore: make sure both TensorCores get (nearly equal) work.
            TB = min(TB, -(-N // cores))
        grid_n = pl.cdiv(N, TB)                             # ragged grid OK

        block_bytes = TB * bytes_per_sample
        vmem_limit = min(vmem_cap,
                         4 * block_bytes + 2 * param_bytes + (4 << 20))

        out = pl.pallas_call(
            functools.partial(_cse_fused_kernel, inv_hw=1.0 / HW),
            out_shape=jax.ShapeDtypeStruct((N, C, HW), jnp.float32),
            grid_spec=pltpu.PrefetchScalarGridSpec(
                num_scalar_prefetch=0,
                grid=(grid_n,),
                in_specs=[
                    pl.BlockSpec((TB, C, HW), lambda n: (n, 0, 0)),  # x
                    pl.BlockSpec((C, Cr), lambda n: (0, 0)),         # folded w1
                    pl.BlockSpec((3, Cr), lambda n: (0, 0)),         # b1/w2/b2
                ],
                out_specs=pl.BlockSpec((TB, C, HW), lambda n: (n, 0, 0)),
            ),
            compiler_params=pltpu.CompilerParams(
                dimension_semantics=("parallel",),
                vmem_limit_bytes=int(vmem_limit)),
        )(x, w1, packed)
        return out.reshape(N, C, H, W)

    # ------------------ split path (huge per-sample planes) ------------------
    thw = block_target_bytes // (_round_up(C, 8) * 4)
    thw = max(128, (thw // 128) * 128)                      # lane-aligned tile
    thw = min(thw, _round_up(HW, 128))
    n_hw = pl.cdiv(HW, thw)

    x_block_bytes = _round_up(C, 8) * thw * 4
    sums_bytes = 8 * _round_up(C, 128) * 4

    vmem_limit_pool = min(vmem_cap,
                          4 * x_block_bytes + 2 * sums_bytes + (4 << 20))
    sums = pl.pallas_call(
        functools.partial(_cse_pool_kernel, hw=HW, thw=thw),
        out_shape=jax.ShapeDtypeStruct((N, 1, C), jnp.float32),
        grid_spec=pltpu.PrefetchScalarGridSpec(
            num_scalar_prefetch=0,
            grid=(N, n_hw),
            in_specs=[pl.BlockSpec((1, C, thw), lambda n, h: (n, 0, h))],
            out_specs=pl.BlockSpec((1, 1, C), lambda n, h: (n, 0, 0)),
        ),
        compiler_params=pltpu.CompilerParams(
            dimension_semantics=("parallel", "arbitrary"),
            vmem_limit_bytes=int(vmem_limit_pool)),
    )(x)

    # Tiny per-sample squeeze/excitation (negligible bytes) in plain JAX.
    pooled = sums[:, 0, :] * (1.0 / HW)                     # (N, C)
    y = jnp.maximum(pooled @ w1 + b1[None, :], 0.0)         # (N, Cr)
    z = jnp.sum(y * w2_pt[0][None, :], axis=-1) + b2_pt[0]  # (N,)
    scale = jax.nn.sigmoid(z).reshape(N, 1, 1)              # (N, 1, 1)

    vmem_limit_scale = min(vmem_cap, 8 * x_block_bytes + (4 << 20))
    out = pl.pallas_call(
        _cse_rescale_kernel,
        out_shape=jax.ShapeDtypeStruct((N, C, HW), jnp.float32),
        grid_spec=pltpu.PrefetchScalarGridSpec(
            num_scalar_prefetch=0,
            grid=(N, n_hw),
            in_specs=[
                pl.BlockSpec((1, C, thw), lambda n, h: (n, 0, h)),   # x
                pl.BlockSpec((1, 1, 1), lambda n, h: (n, 0, 0)),     # scale
            ],
            out_specs=pl.BlockSpec((1, C, thw), lambda n, h: (n, 0, h)),
        ),
        compiler_params=pltpu.CompilerParams(
            dimension_semantics=("parallel", "parallel"),
            vmem_limit_bytes=int(vmem_limit_scale)),
    )(x, scale)
    return out.reshape(N, C, H, W)


# --------------------------------------------------------------------------
# Synthetic parameters & plain-JAX reference
# --------------------------------------------------------------------------
def make_params(C, reduction, key):
    """Deterministic synthetic parameters in PyTorch layouts (BN eval mode)."""
    Cr = C // reduction
    k1, k2, k3, k4 = jax.random.split(key, 4)
    # Conv2d(C, Cr, 1): weight (Cr, C), bias (Cr,)
    w1 = jax.random.normal(k1, (Cr, C), jnp.float32) * 0.1
    b1 = jax.random.normal(k2, (Cr,), jnp.float32) * 0.1
    # BatchNorm2d(Cr): synthetic (nontrivial) running stats / affine params.
    gamma = 1.0 + 0.1 * jnp.arange(Cr, dtype=jnp.float32)
    beta = 0.01 * jnp.arange(Cr, dtype=jnp.float32)
    rmean = 0.05 * jnp.arange(Cr, dtype=jnp.float32)
    rvar = 1.0 + 0.1 * jnp.arange(Cr, dtype=jnp.float32)
    # Conv2d(Cr, 1, 1): weight (1, Cr), bias (1,)
    w2 = jax.random.normal(k3, (1, Cr), jnp.float32) * 0.1
    b2 = jax.random.normal(k4, (1,), jnp.float32) * 0.1
    return (w1, b1, gamma, beta, rmean, rvar, w2, b2)


def cse_reference(x_nchw, params):
    """Plain-JAX reference of the PyTorch forward (BN in eval mode, unfolded)."""
    w1, b1, gamma, beta, rmean, rvar, w2, b2 = params
    pooled = jnp.mean(x_nchw, axis=(2, 3))                       # (N, C)
    y = pooled @ w1.T + b1                                       # (N, Cr)
    y = (y - rmean) * jax.lax.rsqrt(rvar + 1e-5) * gamma + beta
    y = jnp.maximum(y, 0.0)
    z = y @ w2.T + b2                                            # (N, 1)
    scale = jax.nn.sigmoid(z)                                    # (N, 1)
    return x_nchw * scale[:, :, None, None]


if __name__ == "__main__":
    key = jax.random.PRNGKey(0)
    kx1, kp1, kx2, kp2 = jax.random.split(key, 4)

    # --- Test 1: standard small CSE shapes (fused path, HW % 128 == 0). ---
    N, C, H, W = 2, 32, 16, 16
    x1 = jax.random.normal(kx1, (N, C, H, W), jnp.float32)
    p1 = make_params(C, 16, kp1)
    out1 = jax.block_until_ready(cse_forward(x1, p1))
    ref1 = cse_reference(x1, p1)
    assert out1.shape == (N, C, H, W)
    assert jnp.allclose(out1, ref1, atol=1e-5, rtol=1e-5), \
        f"fused path max abs err {jnp.max(jnp.abs(out1 - ref1))}"

    # --- Test 2: ragged batch + HW not a multiple of 128 (masked stores). ---
    N2, C2, H2, W2 = 3, 32, 7, 7
    x2 = jax.random.normal(kx2, (N2, C2, H2, W2), jnp.float32)
    p2 = make_params(C2, 16, kp2)
    bps2 = _round_up(C2, 8) * _round_up(H2 * W2, 128) * 4
    out2 = jax.block_until_ready(
        cse_forward(x2, p2, block_target_bytes=2 * bps2))  # TB=2 -> ragged grid
    ref2 = cse_reference(x2, p2)
    assert jnp.allclose(out2, ref2, atol=1e-5, rtol=1e-5), \
        f"ragged fused path max abs err {jnp.max(jnp.abs(out2 - ref2))}"

    # --- Test 3: force the split (large-sample) path, multi-tile HW accum. ---
    out3 = jax.block_until_ready(
        cse_forward(x1, p1, block_target_bytes=1, large_sample_bytes=1))
    assert jnp.allclose(out3, ref1, atol=1e-5, rtol=1e-5), \
        f"split path max abs err {jnp.max(jnp.abs(out3 - ref1))}"

    # --- Test 4: split path with a partial (masked) spatial tile. ---
    out4 = jax.block_until_ready(
        cse_forward(x2, p2, block_target_bytes=1, large_sample_bytes=1))
    assert jnp.allclose(out4, ref2, atol=1e-5, rtol=1e-5), \
        f"split path (ragged HW) max abs err {jnp.max(jnp.abs(out4 - ref2))}"

    print("KERNEL_OK")
</pallas_src>

<mosaic_0001>
module attributes {stable_mosaic.version = 11 : i64} {
  func.func @_cse_fused_kernel(%arg0: i32, %arg1: memref<2x32x256xf32, #tpu.memory_space<vmem>>, %arg2: memref<32x2xf32, #tpu.memory_space<vmem>>, %arg3: memref<3x2xf32, #tpu.memory_space<vmem>>, %arg4: memref<2x32x256xf32, #tpu.memory_space<vmem>>) attributes {dimension_semantics = [#tpu.dimension_semantics<parallel>], iteration_bounds = array<i64: 1>, scalar_prefetch = 0 : i64, scratch_operands = 0 : i64, tpu.core_type = #tpu.core_type<tc>, window_params = [{transform_indices = @transform_0, window_bounds = array<i64: 2, 32, 256>}, {pipeline_mode = #tpu.pipeline_mode<synchronous>, transform_indices = @transform_1, window_bounds = array<i64: 32, 2>}, {pipeline_mode = #tpu.pipeline_mode<synchronous>, transform_indices = @transform_2, window_bounds = array<i64: 3, 2>}, {transform_indices = @transform_3, window_bounds = array<i64: 2, 32, 256>}]} {
    %c0 = arith.constant 0 : index
    %c0_0 = arith.constant 0 : index
    %c0_1 = arith.constant 0 : index
    %0 = vector.load %arg1[%c0, %c0_0, %c0_1] : memref<2x32x256xf32, #tpu.memory_space<vmem>>, vector<2x32x256xf32>
    %cst = arith.constant dense<0.000000e+00> : vector<2x32xf32>
    %1 = vector.multi_reduction <add>, %0, %cst [2] : vector<2x32x256xf32> to vector<2x32xf32>
    %cst_2 = arith.constant 3.906250e-03 : f32
    %2 = vector.broadcast %cst_2 : f32 to vector<2x32xf32>
    %3 = arith.mulf %1, %2 : vector<2x32xf32>
    %c0_3 = arith.constant 0 : index
    %c0_4 = arith.constant 0 : index
    %4 = vector.load %arg3[%c0_3, %c0_4] : memref<3x2xf32, #tpu.memory_space<vmem>>, vector<3x2xf32>
    %5 = vector.extract_strided_slice %4 {offsets = [0, 0], sizes = [1, 2], strides = [1, 1]} : vector<3x2xf32> to vector<1x2xf32>
    %6 = vector.extract_strided_slice %4 {offsets = [1, 0], sizes = [1, 2], strides = [1, 1]} : vector<3x2xf32> to vector<1x2xf32>
    %7 = vector.extract_strided_slice %4 {offsets = [2, 0], sizes = [1, 1], strides = [1, 1]} : vector<3x2xf32> to vector<1x1xf32>
    %c0_5 = arith.constant 0 : index
    %c0_6 = arith.constant 0 : index
    %8 = vector.load %arg2[%c0_5, %c0_6] : memref<32x2xf32, #tpu.memory_space<vmem>>, vector<32x2xf32>
    %cst_7 = arith.constant dense<0.000000e+00> : vector<2x2xf32>
    %9 = tpu.matmul %3, %8, %cst_7 {dimension_numbers = #tpu.dot_dimension_numbers<[1], [0], [0], [1], [0, 0, 1, 1], [], []>} : vector<2x32xf32>, vector<32x2xf32>, vector<2x2xf32> -> vector<2x2xf32>
    %10 = vector.broadcast %5 : vector<1x2xf32> to vector<2x2xf32>
    %11 = arith.addf %9, %10 : vector<2x2xf32>
    %cst_8 = arith.constant 0.000000e+00 : f32
    %12 = vector.broadcast %cst_8 : f32 to vector<2x2xf32>
    %13 = arith.maximumf %11, %12 : vector<2x2xf32>
    %14 = vector.broadcast %6 : vector<1x2xf32> to vector<2x2xf32>
    %15 = arith.mulf %13, %14 : vector<2x2xf32>
    %cst_9 = arith.constant dense<0.000000e+00> : vector<2xf32>
    %16 = vector.multi_reduction <add>, %15, %cst_9 [1] : vector<2x2xf32> to vector<2xf32>
    %17 = vector.shape_cast %16 : vector<2xf32> to vector<2x1xf32>
    %18 = vector.broadcast %7 : vector<1x1xf32> to vector<2x1xf32>
    %19 = arith.addf %17, %18 : vector<2x1xf32>
    %20 = arith.negf %19 : vector<2x1xf32>
    %21 = math.exp %20 : vector<2x1xf32>
    %cst_10 = arith.constant 1.000000e+00 : f32
    %22 = vector.broadcast %cst_10 : f32 to vector<2x1xf32>
    %23 = arith.addf %22, %21 : vector<2x1xf32>
    %24 = arith.divf %22, %23 : vector<2x1xf32>
    %c0_11 = arith.constant 0 : index
    %c0_12 = arith.constant 0 : index
    %c0_13 = arith.constant 0 : index
    %25 = vector.load %arg1[%c0_11, %c0_12, %c0_13] : memref<2x32x256xf32, #tpu.memory_space<vmem>>, vector<2x32x256xf32>
    %26 = vector.shape_cast %24 : vector<2x1xf32> to vector<2x1x1xf32>
    %27 = vector.broadcast %26 : vector<2x1x1xf32> to vector<2x32x256xf32>
    %28 = arith.mulf %25, %27 : vector<2x32x256xf32>
    %c0_14 = arith.constant 0 : index
    %c0_15 = arith.constant 0 : index
    %c0_16 = arith.constant 0 : index
    %29 = vector.load %arg4[%c0_14, %c0_15, %c0_16] : memref<2x32x256xf32, #tpu.memory_space<vmem>>, vector<2x32x256xf32>
    tpu.vector_store %arg4[%c0_14, %c0_15, %c0_16], %28 {strides = array<i32>} : memref<2x32x256xf32, #tpu.memory_space<vmem>>, vector<2x32x256xf32>,
    return
  }
  func.func @transform_0(%arg0: i32) -> (i32, i32, i32) {
    %c0_i32 = arith.constant 0 : i32
    %c0_i32_0 = arith.constant 0 : i32
    %c0_i32_1 = arith.constant 0 : i32
    return %arg0, %c0_i32, %c0_i32_0 : i32, i32, i32
  }
  func.func @transform_1(%arg0: i32) -> (i32, i32) {
    %c0_i32 = arith.constant 0 : i32
    %c0_i32_0 = arith.constant 0 : i32
    %c0_i32_1 = arith.constant 0 : i32
    return %c0_i32, %c0_i32_0 : i32, i32
  }
  func.func @transform_2(%arg0: i32) -> (i32, i32) {
    %c0_i32 = arith.constant 0 : i32
    %c0_i32_0 = arith.constant 0 : i32
    %c0_i32_1 = arith.constant 0 : i32
    return %c0_i32, %c0_i32_0 : i32, i32
  }
  func.func @transform_3(%arg0: i32) -> (i32, i32, i32) {
    %c0_i32 = arith.constant 0 : i32
    %c0_i32_0 = arith.constant 0 : i32
    %c0_i32_1 = arith.constant 0 : i32
    return %arg0, %c0_i32, %c0_i32_0 : i32, i32, i32
  }
}

</mosaic_0001>

<llo_original>
// kernel: tpu_custom_call.1
$region0: #{tpu_custom_call.1}
  #allocation0 [shape = 'u32[]', space=smem, size = 0x4, offset = 0x4, fixed_abs, tag = 'smem constant byte address 0x4 - core index']
  #allocation1 [shape = 'u32[72,128]{1,0:T(1,128)}', space=vmem, size = 0x9000, scoped, tag = 'internal scratch']
  %s0 = inlined_call_operand.hbm [shape: f32[2,32,256], index: 0, kind: input, shape index: {}]
  %s1 = inlined_call_operand.vmem [shape: f32[32,2], index: 1, kind: input, shape index: {}]
  %s2 = inlined_call_operand.vmem [shape: f32[3,2], index: 2, kind: input, shape index: {}]
  %s3 = inlined_call_operand.hbm [shape: f32[2,32,256], index: 3, kind: output, shape index: {}]
  %s4 = sld [smem:[#allocation0]]
  $region26: #{tpu_custom_call.1} parent=0
    _
  %s6 = ssub.s32 1, %s4
  %s7 = scalar_select 0, %s6, %s4
  $region1: #{tpu_custom_call.1} parent=0
    #allocation2 [shape = 'u8[65536]{0}', space=vmem, size = 0x10000, scoped, tag = 'input window, operand 0, single buffered']
    #allocation3 [shape = 's32[1]{0}', space=sflag, size = 0x4, scoped, tag = 'scoped memory for tpu_custom_call.1']
    #allocation4 [shape = 's32[1]{0}', space=sflag, size = 0x4, scoped, tag = 'scoped memory for tpu_custom_call.1']
    #allocation5 [shape = 'u8[65536]{0}', space=vmem, size = 0x10000, scoped, tag = 'output window, operand 0, single buffered']
    %8 = vsyncpa [#allocation3], 0
    %9 = vsyncpa [#allocation4], 0
    // Predicated region
    $region2: #{tpu_custom_call.1} parent=1 // pred_check
      _
    $region3: #{tpu_custom_call.1} parent=1 // pred_check_branch
      %11 = sbr.rel (0) target = $region5
    $region4: #{tpu_custom_call.1} parent=1 // pred_region
      %13 = vsyncadd [#allocation3], 0
      %s14 = sshll.u32 %s0, 4
      %s15 = int_to_ptr.hbm [resolvable:$true] %s14
      %s16 = sshll.u32 [#allocation2], 4
      %s17 = int_to_ptr.vmem [resolvable:$true] %s16
      %22 = dma.hbm_to_vmem [thread:$0]  %s15, 2048, %s17, [#allocation3], 256, 256, 16
    $region5: #{tpu_custom_call.1} parent=1 // pred_fallthru
      _
    // Predicated region
    $region6: #{tpu_custom_call.1} parent=1 // pred_check
      _
    $region7: #{tpu_custom_call.1} parent=1 // pred_check_branch
      %24 = sbr.rel (0) target = $region9
    $region8: #{tpu_custom_call.1} parent=1 // pred_region
      _
    $region9: #{tpu_custom_call.1} parent=1 // pred_fallthru
      _
    // Predicated region
    $region10: #{tpu_custom_call.1} parent=1 // pred_check
      _
    $region11: #{tpu_custom_call.1} parent=1 // pred_check_branch
      %26 = sbr.rel (0) target = $region13
    $region12: #{tpu_custom_call.1} parent=1 // pred_region
      _
    $region13: #{tpu_custom_call.1} parent=1 // pred_fallthru
      _
    // Predicated region
    $region14: #{tpu_custom_call.1} parent=1 // pred_check
      _
    $region15: #{tpu_custom_call.1} parent=1 // pred_check_branch
      %28 = sbr.rel (0) target = $region17
    $region16: #{tpu_custom_call.1} parent=1 // pred_region
      %30 = dma.done [#allocation3], 2048
    $region17: #{tpu_custom_call.1} parent=1 // pred_fallthru
      _
    %v31 = vld [vmem:[#allocation2] sm:$0xff]
    %v32 = vld [vmem:[#allocation2 + $0x8] sm:$0xff]
    %v33 = vld [vmem:[#allocation2 + $0x10] sm:$0xff]
    %v34 = vld [vmem:[#allocation2 + $0x18] sm:$0xff]
    %v35 = vld [vmem:[#allocation2 + $0x20] sm:$0xff]
    %v36 = vld [vmem:[#allocation2 + $0x28] sm:$0xff]
    %v37 = vld [vmem:[#allocation2 + $0x30] sm:$0xff]
    %v38 = vld [vmem:[#allocation2 + $0x38] sm:$0xff]
    %v39 = vld [vmem:[#allocation2 + $0x40] sm:$0xff]
    %v40 = vld [vmem:[#allocation2 + $0x48] sm:$0xff]
    %v41 = vld [vmem:[#allocation2 + $0x50] sm:$0xff]
    %v42 = vld [vmem:[#allocation2 + $0x58] sm:$0xff]
    %v43 = vld [vmem:[#allocation2 + $0x60] sm:$0xff]
    %v44 = vld [vmem:[#allocation2 + $0x68] sm:$0xff]
    %v45 = vld [vmem:[#allocation2 + $0x70] sm:$0xff]
    %v46 = vld [vmem:[#allocation2 + $0x78] sm:$0xff]
    %v47 = vadd.f32 %v31, %v32
    %48 = vadd.xlane.f32.xlu0 %v47
    %v49 = vpop.xlane.xlu0 %48
    %v50 = vadd.f32 %v33, %v34
    %51 = vadd.xlane.f32.xlu0 %v50
    %v52 = vpop.xlane.xlu0 %51
    %v53 = vadd.f32 %v35, %v36
    %54 = vadd.xlane.f32.xlu0 %v53
    %v55 = vpop.xlane.xlu0 %54
    %v56 = vadd.f32 %v37, %v38
    %57 = vadd.xlane.f32.xlu0 %v56
    %v58 = vpop.xlane.xlu0 %57
    %v59 = vadd.f32 %v39, %v40
    %60 = vadd.xlane.f32.xlu0 %v59
    %v61 = vpop.xlane.xlu0 %60
    %v62 = vadd.f32 %v41, %v42
    %63 = vadd.xlane.f32.xlu0 %v62
    %v64 = vpop.xlane.xlu0 %63
    %v65 = vadd.f32 %v43, %v44
    %66 = vadd.xlane.f32.xlu0 %v65
    %v67 = vpop.xlane.xlu0 %66
    %v68 = vadd.f32 %v45, %v46
    %69 = vadd.xlane.f32.xlu0 %v68
    %v70 = vpop.xlane.xlu0 %69
    %v71 = vmul.f32 %v49, 0.00390625
    %v72 = vmul.f32 %v52, 0.00390625
    %v73 = vmul.f32 %v55, 0.00390625
    %v74 = vmul.f32 %v58, 0.00390625
    %v75 = vmul.f32 %v61, 0.00390625
    %v76 = vmul.f32 %v64, 0.00390625
    %v77 = vmul.f32 %v67, 0.00390625
    %v78 = vmul.f32 %v70, 0.00390625
    %v79 = vld [vmem:[%s2] sm:$0x7]
    %v80 = vld [vmem:[%s1] sm:$0xff]
    %v81 = vld [vmem:[%s1 + $0x8] sm:$0xff]
    %v82 = vld [vmem:[%s1 + $0x10] sm:$0xff]
    %v83 = vld [vmem:[%s1 + $0x18] sm:$0xff]
    %v84 = vperm.slane %v79, 0
    %v93 = vlaneseq
    %v94 = vand.u32 %v93, 127
    %v95 = vperm.slane %v71, %v94
    %v96 = vadd.s32 %v94, 4294967288
    %v97 = vperm.slane %v72, %v96
    %vm98 = vcmask 130112
    %v99 = vsel %vm98, %v97, %v95
    %v100 = vadd.s32 %v94, 4294967280
    %v101 = vperm.slane %v73, %v100
    %vm102 = vcmask 195712
    %v103 = vsel %vm102, %v101, %v99
    %v104 = vadd.s32 %v94, 4294967272
    %v105 = vperm.slane %v74, %v104
    %vm106 = vcmask 261312
    %v107 = vsel %vm106, %v105, %v103
    %v108 = vperm.slane %v75, %v94
    %v109 = vperm.slane %v76, %v96
    %v110 = vsel %vm98, %v109, %v108
    %v111 = vperm.slane %v77, %v100
    %v112 = vsel %vm102, %v111, %v110
    %v113 = vperm.slane %v78, %v104
    %v114 = vsel %vm106, %v113, %v112
    %vm115 = vcmask 1041409
    %v116 = vsel %vm115, %v114, %v107
    %vm117 = vcmask 261120
    %v118 = vsel %vm117, %v116, 0
    %120 = vmatpush.msra.mxu0 0.0
    %121 = vmatpush.msra.mxu0 0.0
    %122 = vmatpush.msra.mxu0 0.0
    %123 = vmatpush.msra.mxu0 0.0
    %124 = vmatpush.msra.mxu0 0.0
    %125 = vmatpush.msra.mxu0 0.0
    %126 = vmatpush.msra.mxu0 0.0
    %127 = vmatpush.msra.mxu0 0.0
    %128 = vmatpush.msra.mxu0 0.0
    %129 = vmatpush.msra.mxu0 0.0
    %130 = vmatpush.msra.mxu0 0.0
    %131 = vmatpush.msra.mxu0 0.0
    %132 = vmatpush.msra.mxu0 %v83
    %133 = vmatpush.msra.mxu0 %v82
    %134 = vmatpush.msra.mxu0 %v81
    %135 = vmatpush.msra.mxu0 %v80
    %136 = vmatmul.f32.gmra.mxu0 %v118
    %v137 = vpop.f32.mrf.mxu0
    %v138 = vadd.f32 %v84, %v137
    %139 = vdwg.mxu0
    %v140 = vmax.f32 %v138, 0.0
    %v141 = vperm.slane %v79, 1
    %v142 = vmul.f32 %v140, %v141
    %vm143 = vcmask 9216
    %v144 = vsel %vm143, %v142, 0.0
    %145 = vadd.xlane.f32.xlu0 %v144
    %v146 = vpop.xlane.xlu0 %145
    %v147 = vperm.slane %v79, 2
    %v148 = vadd.f32 %v146, %v147
    %v149 = vxor.u32 %v148, 2147483648
    %v150 = vmul.f32 %v149, 1.442695
    %v151 = vpow.pop %v150
    %v152 = vadd.f32 %v151, 1.0
    %v153 = vrcp.pop %v152
    %v154 = vmul.f32 %v152, %v153
    %v155 = vsub.f32 1.0, %v154
    %v156 = vmul.f32 %v153, %v155
    %v157 = vadd.f32 %v153, %v156
    %vm158 = vweird.f32 %v152
    %vm159 = vweird.f32 %v153
    %vm160 = vmor %vm158, %vm159
    %v161 = vsel %vm160, %v153, %v157
    %v162 = vand.u32 2147483647, %v152
    %vm163 = vcmp.eq.f32.partialorder %v162, 8.507059e+37
    %v164 = vand.u32 %v152, 2147483648
    %v165 = vor.u32 1.1754944e-38, %v164
    %v166 = vsel %vm163, %v165, %v161
    %v167 = vmul.f32 1.0, %v166
    %v169 = vrot.slane %v167, 1
    %v170 = vperm.slane %v167, 0
    %v171 = vperm.slane %v169, 0
    %172 = vset.pattern.permute.xlu0 0
    %173 = vperm.xlu0 %172, %v170
    %v174 = vpop.permute.xlu0 %173
    %176 = vset.pattern.permute.xlu0 0
    %177 = vperm.xlu0 %176, %v171
    %v178 = vpop.permute.xlu0 %177
    %v180 = vmul.f32 %v31, %v174
    %v181 = vmul.f32 %v32, %v174
    %v182 = vmul.f32 %v33, %v174
    %v183 = vmul.f32 %v34, %v174
    %v184 = vmul.f32 %v35, %v174
    %v185 = vmul.f32 %v36, %v174
    %v186 = vmul.f32 %v37, %v174
    %v187 = vmul.f32 %v38, %v174
    %v188 = vmul.f32 %v39, %v178
    %v189 = vmul.f32 %v40, %v178
    %v190 = vmul.f32 %v41, %v178
    %v191 = vmul.f32 %v42, %v178
    %v192 = vmul.f32 %v43, %v178
    %v193 = vmul.f32 %v44, %v178
    %v194 = vmul.f32 %v45, %v178
    %v195 = vmul.f32 %v46, %v178
    %196 = vst [vmem:[#allocation5] sm:$0xff] %v180
    %197 = vst [vmem:[#allocation5 + $0x8] sm:$0xff] %v181
    %198 = vst [vmem:[#allocation5 + $0x10] sm:$0xff] %v182
    %199 = vst [vmem:[#allocation5 + $0x18] sm:$0xff] %v183
    %200 = vst [vmem:[#allocation5 + $0x20] sm:$0xff] %v184
    %201 = vst [vmem:[#allocation5 + $0x28] sm:$0xff] %v185
    %202 = vst [vmem:[#allocation5 + $0x30] sm:$0xff] %v186
    %203 = vst [vmem:[#allocation5 + $0x38] sm:$0xff] %v187
    %204 = vst [vmem:[#allocation5 + $0x40] sm:$0xff] %v188
    %205 = vst [vmem:[#allocation5 + $0x48] sm:$0xff] %v189
    %206 = vst [vmem:[#allocation5 + $0x50] sm:$0xff] %v190
    %207 = vst [vmem:[#allocation5 + $0x58] sm:$0xff] %v191
    %208 = vst [vmem:[#allocation5 + $0x60] sm:$0xff] %v192
    %209 = vst [vmem:[#allocation5 + $0x68] sm:$0xff] %v193
    %210 = vst [vmem:[#allocation5 + $0x70] sm:$0xff] %v194
    %211 = vst [vmem:[#allocation5 + $0x78] sm:$0xff] %v195
    // Predicated region
    $region18: #{tpu_custom_call.1} parent=1 // pred_check
      _
    $region19: #{tpu_custom_call.1} parent=1 // pred_check_branch
      %213 = sbr.rel (0) target = $region21
    $region20: #{tpu_custom_call.1} parent=1 // pred_region
      %215 = vsyncadd [#allocation4], 0
      %s216 = sshll.u32 [#allocation5], 4
      %s217 = int_to_ptr.vmem [resolvable:$true] %s216
      %s218 = sshll.u32 %s3, 4
      %s219 = int_to_ptr.hbm [resolvable:$true] %s218
      %224 = dma.vmem_to_hbm [thread:$0]  %s217, 2048, %s219, [#allocation4], 256, 256, 16
    $region21: #{tpu_custom_call.1} parent=1 // pred_fallthru
      _
    // Predicated region
    $region22: #{tpu_custom_call.1} parent=1 // pred_check
      _
    $region23: #{tpu_custom_call.1} parent=1 // pred_check_branch
      %226 = sbr.rel (0) target = $region25
    $region24: #{tpu_custom_call.1} parent=1 // pred_region
      %228 = dma.done [#allocation4], 2048
    $region25: #{tpu_custom_call.1} parent=1 // pred_fallthru
      _
    %229 = vsyncpa [#allocation3], 1
    %230 = vsyncpa [#allocation4], 1

</llo_original>
